<compile_context>
chip_gen: v7x
topology: tpu7x:2x2x1
jax: 0.10.0
libtpu: 0.0.40
codegen_flags: <defaults>
</compile_context>

<pallas_src>
import jax
import jax.numpy as jnp
from jax.experimental import pallas as pl
from jax.experimental.pallas import tpu as pltpu


def _round_up(n, m):
    return ((n + m - 1) // m) * m


def _linear_kernel(x_ref, w_ref, b_ref, o_ref):
    # x_ref: (TILE_B, F) VMEM tile of the input (streamed / double-buffered)
    # w_ref: (1, F)      VMEM, lane-dense weight, resident across grid steps
    # b_ref: (1,)        SMEM scalar bias
    # o_ref: (TILE_B, 1) VMEM output tile
    x = x_ref[...].astype(jnp.float32)
    w = w_ref[...].astype(jnp.float32)            # broadcasts over the row axis
    y = jnp.sum(x * w, axis=1, keepdims=True)     # VPU mul + XLU cross-lane reduce
    o_ref[...] = (y + b_ref[0]).astype(o_ref.dtype)


def _scoped_vmem_limit_bytes():
    """~70% of this generation's physical VMEM (v7x: 64 MiB, v5e/v6e: 128 MiB)."""
    cap = 64 << 20                                # conservative fallback (v7x per-TC)
    try:
        info = pltpu.get_tpu_info()
        cap = int(getattr(info, "vmem_capacity_bytes", cap)) or cap
    except Exception:
        pass
    cap = max(cap, 32 << 20)
    return int(cap * 0.7)


def _choose_tile_b(batch, n_feature, x_itemsize, out_itemsize, vmem_limit):
    # Sublane quantum: 8 rows for 32-bit, 16 for 16-bit, 32 for 8-bit dtypes.
    sub = max(8, 32 // max(1, x_itemsize))
    if batch <= sub:
        return batch                              # single block == full batch dim
    # Real VMEM bytes per row, including lane padding to 128.
    x_row = _round_up(n_feature, 128) * x_itemsize
    o_row = 128 * out_itemsize                    # (tile_b, 1) block still spans 128 lanes
    # Double-buffered x + out tiles must fit the scoped-VMEM budget, leaving
    # headroom for the resident weight and Mosaic-internal scratch.
    budget = max(1 << 20, vmem_limit - (4 << 20) - x_row)
    by_vmem = budget // (2 * (x_row + o_row))
    # 8-16 MiB x tiles already amortize the ~0.35 us per-step overhead to <5%
    # on every generation; larger only adds pipeline tail latency.
    by_cap = max(sub, (16 << 20) // x_row)
    # Keep at least 2 grid steps so both v7x TensorCores get work.
    by_cores = _round_up(-(-batch // 2), sub)
    tile = min(by_vmem, by_cap, by_cores)
    tile = max(sub, (tile // sub) * sub)
    return int(min(tile, _round_up(batch, sub)))


def linear_forward(x, weight, bias, tile_b=None):
    """y = x @ weight.T + bias, matching torch.nn.Linear(n_feature, 1).

    x:      (B, F)
    weight: (1, F)   (PyTorch convention; kept lane-dense, never transposed)
    bias:   (1,)
    returns (B, 1)
    """
    B, F = x.shape
    assert weight.shape == (1, F)
    assert bias.shape == (1,)

    vmem_limit = _scoped_vmem_limit_bytes()
    if tile_b is None:
        tile_b = _choose_tile_b(B, F, x.dtype.itemsize, x.dtype.itemsize, vmem_limit)

    grid = (pl.cdiv(B, tile_b),)   # ragged last block handled by Pallas masking
    cost = pl.CostEstimate(
        flops=2 * B * F,
        transcendentals=0,
        bytes_accessed=B * F * x.dtype.itemsize
        + B * x.dtype.itemsize
        + F * weight.dtype.itemsize
        + bias.dtype.itemsize,
    )

    out = pl.pallas_call(
        _linear_kernel,
        out_shape=jax.ShapeDtypeStruct((B, 1), x.dtype),
        grid=grid,
        in_specs=[
            pl.BlockSpec((tile_b, F), lambda i: (i, 0)),        # streamed x tiles
            pl.BlockSpec((1, F), lambda i: (0, 0)),             # resident weight
            pl.BlockSpec(memory_space=pltpu.MemorySpace.SMEM),  # scalar bias
        ],
        out_specs=pl.BlockSpec((tile_b, 1), lambda i: (i, 0)),
        compiler_params=pltpu.CompilerParams(
            # Batch tiles are independent -> shard across TensorCores (v7x).
            dimension_semantics=("parallel",),
            vmem_limit_bytes=vmem_limit,
        ),
        cost_estimate=cost,
    )(x, weight, bias)
    # TODO(synk): lane-dense output (out block (1, tile_b)) would remove the
    #   masked column stores, and for F <= 64 packing 128//F rows per lane-row
    #   would remove the 4x lane waste; both are secondary since the streamed
    #   x tiles dominate HBM traffic by >= F:1.
    # TODO(synk): for very large F, add a second ("arbitrary") reduction grid
    #   axis over F with an f32 VMEM accumulator instead of one (tile_b, F) block.
    return out


if __name__ == "__main__":
    key = jax.random.PRNGKey(0)
    k_x, k_w, k_b, k_x2 = jax.random.split(key, 4)

    # Small case matching the module spec (n_feature features -> 1 output).
    batch, n_feature = 8, 32
    bound = 1.0 / jnp.sqrt(jnp.float32(n_feature))
    weight = jax.random.uniform(
        k_w, (1, n_feature), jnp.float32, minval=-bound, maxval=bound
    )
    bias = jax.random.uniform(
        k_b, (1,), jnp.float32, minval=-bound, maxval=bound
    )
    x = jax.random.normal(k_x, (batch, n_feature), jnp.float32)

    y = jax.block_until_ready(linear_forward(x, weight, bias))
    y_ref = x @ weight.T + bias
    assert y.shape == (batch, 1)
    assert jnp.allclose(y, y_ref, atol=1e-5, rtol=1e-5)

    # Second check: exercises the multi-tile pipelined path with a ragged
    # final block (batch not a multiple of the tile size) and a >=2-step grid.
    batch2, n_feature2 = 1030, 256
    bound2 = 1.0 / jnp.sqrt(jnp.float32(n_feature2))
    k_w2, k_b2 = jax.random.split(k_b)
    weight2 = jax.random.uniform(
        k_w2, (1, n_feature2), jnp.float32, minval=-bound2, maxval=bound2
    )
    bias2 = jax.random.uniform(
        k_b2, (1,), jnp.float32, minval=-bound2, maxval=bound2
    )
    x2 = jax.random.normal(k_x2, (batch2, n_feature2), jnp.float32)

    y2 = jax.block_until_ready(linear_forward(x2, weight2, bias2))
    y2_ref = x2 @ weight2.T + bias2
    assert y2.shape == (batch2, 1)
    assert jnp.allclose(y2, y2_ref, atol=1e-4, rtol=1e-4)

    print("KERNEL_OK")
</pallas_src>

<mosaic_0001>
module attributes {stable_mosaic.version = 11 : i64} {
  func.func @_linear_kernel(%arg0: i32, %arg1: memref<8x32xf32, #tpu.memory_space<vmem>>, %arg2: memref<1x32xf32, #tpu.memory_space<vmem>>, %arg3: memref<1xf32, #tpu.memory_space<smem>>, %arg4: memref<8x1xf32, #tpu.memory_space<vmem>>) attributes {dimension_semantics = [#tpu.dimension_semantics<parallel>], iteration_bounds = array<i64: 1>, scalar_prefetch = 0 : i64, scratch_operands = 0 : i64, tpu.core_type = #tpu.core_type<tc>, window_params = [{transform_indices = @transform_0, window_bounds = array<i64: 8, 32>}, {pipeline_mode = #tpu.pipeline_mode<synchronous>, transform_indices = @transform_1, window_bounds = array<i64: 1, 32>}, {transform_indices = @transform_2, window_bounds = array<i64: 1>}, {transform_indices = @transform_3, window_bounds = array<i64: 8, 1>}]} {
    %c0 = arith.constant 0 : index
    %c0_0 = arith.constant 0 : index
    %0 = vector.load %arg1[%c0, %c0_0] : memref<8x32xf32, #tpu.memory_space<vmem>>, vector<8x32xf32>
    %c0_1 = arith.constant 0 : index
    %c0_2 = arith.constant 0 : index
    %1 = vector.load %arg2[%c0_1, %c0_2] : memref<1x32xf32, #tpu.memory_space<vmem>>, vector<1x32xf32>
    %2 = vector.broadcast %1 : vector<1x32xf32> to vector<8x32xf32>
    %3 = arith.mulf %0, %2 : vector<8x32xf32>
    %cst = arith.constant dense<0.000000e+00> : vector<8xf32>
    %4 = vector.multi_reduction <add>, %3, %cst [1] : vector<8x32xf32> to vector<8xf32>
    %5 = vector.shape_cast %4 : vector<8xf32> to vector<8x1xf32>
    %c0_3 = arith.constant 0 : index
    %6 = memref.load %arg3[%c0_3] : memref<1xf32, #tpu.memory_space<smem>>
    %7 = vector.broadcast %6 : f32 to vector<8x1xf32>
    %8 = arith.addf %5, %7 : vector<8x1xf32>
    %c0_4 = arith.constant 0 : index
    %c0_5 = arith.constant 0 : index
    %9 = vector.load %arg4[%c0_4, %c0_5] : memref<8x1xf32, #tpu.memory_space<vmem>>, vector<8x1xf32>
    tpu.vector_store %arg4[%c0_4, %c0_5], %8 {strides = array<i32>} : memref<8x1xf32, #tpu.memory_space<vmem>>, vector<8x1xf32>,
    return
  }
  func.func @transform_0(%arg0: i32) -> (i32, i32) {
    %c0_i32 = arith.constant 0 : i32
    %c0_i32_0 = arith.constant 0 : i32
    return %arg0, %c0_i32 : i32, i32
  }
  func.func @transform_1(%arg0: i32) -> (i32, i32) {
    %c0_i32 = arith.constant 0 : i32
    %c0_i32_0 = arith.constant 0 : i32
    %c0_i32_1 = arith.constant 0 : i32
    return %c0_i32, %c0_i32_0 : i32, i32
  }
  func.func @transform_2(%arg0: i32) -> i32 {
    %c0_i32 = arith.constant 0 : i32
    %c0_i32_0 = arith.constant 0 : i32
    return %c0_i32 : i32
  }
  func.func @transform_3(%arg0: i32) -> (i32, i32) {
    %c0_i32 = arith.constant 0 : i32
    %c0_i32_0 = arith.constant 0 : i32
    return %arg0, %c0_i32 : i32, i32
  }
}

</mosaic_0001>

<llo_original>
// kernel: tpu_custom_call.1
$region0: #{tpu_custom_call.1}
  #allocation0 [shape = 'u32[]', space=smem, size = 0x4, offset = 0x4, fixed_abs, tag = 'smem constant byte address 0x4 - core index']
  #allocation1 [shape = 'u32[144,128]{1,0:T(1,128)}', space=vmem, size = 0x12000, scoped, tag = 'internal scratch']
  #allocation2 [shape = 'f32[1]{0:T(128)S(6)}', space=smem, size = 0x200, scoped, tag = 'scoped memory for tpu_custom_call.1']
  %s0 = inlined_call_operand.hbm [shape: f32[8,32], index: 0, kind: input, shape index: {}]
  %s1 = inlined_call_operand.vmem [shape: f32[1,32], index: 1, kind: input, shape index: {}]
  %s2 = inlined_call_operand.<no memory space> [shape: f32[1], index: 2, kind: input, shape index: {}]
  %s3 = inlined_call_operand.vmem [shape: f32[8,1], index: 3, kind: output, shape index: {}]
  %s4 = sld [smem:[#allocation0]]
  $region26: #{tpu_custom_call.1} parent=0
    _
  %s6 = ssub.s32 1, %s4
  %s7 = scalar_select 0, %s6, %s4
  %8 = sst [smem:[#allocation2]] %s2
  $region1: #{tpu_custom_call.1} parent=0
    #allocation3 [shape = 'u8[4096]{0}', space=vmem, size = 0x1000, scoped, tag = 'input window, operand 0, single buffered']
    #allocation4 [shape = 's32[1]{0}', space=sflag, size = 0x4, scoped, tag = 'scoped memory for tpu_custom_call.1']
    %9 = vsyncpa [#allocation4], 0
    // Predicated region
    $region2: #{tpu_custom_call.1} parent=1 // pred_check
      _
    $region3: #{tpu_custom_call.1} parent=1 // pred_check_branch
      %11 = sbr.rel (0) target = $region5
    $region4: #{tpu_custom_call.1} parent=1 // pred_region
      %s13 = ssub.s32 128, 128
      %14 = vsyncadd [#allocation4], %s13
      %s16 = sshll.u32 [#allocation3], 4
      %s17 = int_to_ptr.vmem [resolvable:$true] %s16
      %19 = dma.hbm_to_vmem [thread:$0]  %s0, 128, %s17, [#allocation4]
    $region5: #{tpu_custom_call.1} parent=1 // pred_fallthru
      _
    // Predicated region
    $region6: #{tpu_custom_call.1} parent=1 // pred_check
      _
    $region7: #{tpu_custom_call.1} parent=1 // pred_check_branch
      %21 = sbr.rel (0) target = $region9
    $region8: #{tpu_custom_call.1} parent=1 // pred_region
      _
    $region9: #{tpu_custom_call.1} parent=1 // pred_fallthru
      _
    // Predicated region
    $region10: #{tpu_custom_call.1} parent=1 // pred_check
      _
    $region11: #{tpu_custom_call.1} parent=1 // pred_check_branch
      %23 = sbr.rel (0) target = $region13
    $region12: #{tpu_custom_call.1} parent=1 // pred_region
      _
    $region13: #{tpu_custom_call.1} parent=1 // pred_fallthru
      _
    // Predicated region
    $region14: #{tpu_custom_call.1} parent=1 // pred_check
      _
    $region15: #{tpu_custom_call.1} parent=1 // pred_check_branch
      %25 = sbr.rel (0) target = $region17
    $region16: #{tpu_custom_call.1} parent=1 // pred_region
      %26 = dma.done [#allocation4], 128
    $region17: #{tpu_custom_call.1} parent=1 // pred_fallthru
      _
    %v27 = vld [vmem:[#allocation3] sm:$0xff]
    %v28 = vld [vmem:[%s1] sm:$0x1]
    %v30 = vlaneseq
    %v31 = vshrl.u32 %v30, 7
    %v32 = vsub.s32 0, %v31
    %v33 = vrot.slane %v28, %v32
    %v35 = vmul.f32 %v27, %v33
    %vm36 = vcmask 261120
    %v37 = vsel %vm36, %v35, 0.0
    %38 = vadd.xlane.f32.xlu0 %v37
    %v39 = vpop.xlane.xlu0 %38
    %s40 = sld [smem:[#allocation2]]
    %v41 = vstv %s40
    %v42 = vadd.f32 %v39, %v41
    %vm43 = vcmask 7168
    %44 = vst.msk [vmem:[%s3] sm:$0xff] %vm43, %v42
    // Predicated region
    $region18: #{tpu_custom_call.1} parent=1 // pred_check
      _
    $region19: #{tpu_custom_call.1} parent=1 // pred_check_branch
      %46 = sbr.rel (0) target = $region21
    $region20: #{tpu_custom_call.1} parent=1 // pred_region
      _
    $region21: #{tpu_custom_call.1} parent=1 // pred_fallthru
      _
    // Predicated region
    $region22: #{tpu_custom_call.1} parent=1 // pred_check
      _
    $region23: #{tpu_custom_call.1} parent=1 // pred_check_branch
      %48 = sbr.rel (0) target = $region25
    $region24: #{tpu_custom_call.1} parent=1 // pred_region
      _
    $region25: #{tpu_custom_call.1} parent=1 // pred_fallthru
      _
    %49 = vsyncpa [#allocation4], 1

</llo_original>
